<compile_context>
chip_gen: v7x
topology: tpu7x:2x2x1
jax: 0.10.0
libtpu: 0.0.40
codegen_flags: <defaults>
</compile_context>

<pallas_src>
import functools

import jax
import jax.numpy as jnp
from jax.experimental import pallas as pl
from jax.experimental.pallas import tpu as pltpu


# ----------------------------------------------------------------------------
# Kernel: fused joint-Q + V MLP (3 layers each, block-stacked into one chain).
# ----------------------------------------------------------------------------
def _qtran_fused_kernel(s_ref, a_ref, w1s_ref, w1a_ref, b1_ref,
                        w2_ref, b2_ref, w3_ref, b3_ref, out_ref):
    # Layer 1: split-K matmul (states and flat actions as separate operands).
    # MXU inputs may be bf16; accumulation is always f32.
    h1 = jnp.dot(s_ref[...], w1s_ref[...], preferred_element_type=jnp.float32)
    h1 = h1 + jnp.dot(a_ref[...], w1a_ref[...],
                      preferred_element_type=jnp.float32)
    h1 = jnp.maximum(h1 + b1_ref[...], 0.0)          # f32 VPU bias + ReLU
    # Layer 2 (block-diagonal -> the two networks stay independent).
    h2 = jnp.dot(h1.astype(w2_ref.dtype), w2_ref[...],
                 preferred_element_type=jnp.float32)
    h2 = jnp.maximum(h2 + b2_ref[...], 0.0)           # f32 VPU bias + ReLU
    # Layer 3: (tb, 2) output — col 0 = joint_q, col 1 = v.
    out = jnp.dot(h2.astype(w3_ref.dtype), w3_ref[...],
                  preferred_element_type=jnp.float32)
    out_ref[...] = (out + b3_ref[...]).astype(out_ref.dtype)


# ----------------------------------------------------------------------------
# Parameter helpers.
# ----------------------------------------------------------------------------
def make_mlp_params(key, d_in, d_hidden, d_out):
    """Deterministic 3-layer MLP params (PyTorch-Linear-like uniform init)."""
    ks = jax.random.split(key, 6)

    def lin(kw, kb, fan_in, fan_out):
        bound = 1.0 / jnp.sqrt(float(fan_in))
        w = jax.random.uniform(kw, (fan_in, fan_out), jnp.float32, -bound, bound)
        b = jax.random.uniform(kb, (1, fan_out), jnp.float32, -bound, bound)
        return w, b

    w1, b1 = lin(ks[0], ks[1], d_in, d_hidden)
    w2, b2 = lin(ks[2], ks[3], d_hidden, d_hidden)
    w3, b3 = lin(ks[4], ks[5], d_hidden, d_out)
    return (w1, b1, w2, b2, w3, b3)


def pack_qtran_params(joint_params, v_params, state_dim):
    """One-time block-stacking of the two MLPs into a single fused param set.

    Column block [0:H] of every layer is the joint-Q network, [H:2H] is V.
    (If the surrounding model ever runs several QTran heads, stack them here
    too to widen the lane dimension toward 256 for v6e/v7x MXU utilization.)
    """
    w1j, b1j, w2j, b2j, w3j, b3j = joint_params
    w1v, b1v, w2v, b2v, w3v, b3v = v_params
    H = w1j.shape[1]
    na = w1j.shape[0] - state_dim  # n_agents * action_dim
    dt = w1j.dtype

    # Layer 1: split the joint W1 rows into state rows / action rows.
    w1s = jnp.concatenate([w1j[:state_dim, :], w1v], axis=1)              # (S, 2H)
    w1a = jnp.concatenate([w1j[state_dim:, :],
                           jnp.zeros((na, H), dt)], axis=1)               # (NA, 2H)
    b1 = jnp.concatenate([b1j, b1v], axis=1)                              # (1, 2H)
    # Layer 2: block-diagonal (the two sub-networks never mix).
    zH = jnp.zeros((H, H), dt)
    w2 = jnp.block([[w2j, zH], [zH, w2v]])                                # (2H, 2H)
    b2 = jnp.concatenate([b2j, b2v], axis=1)                              # (1, 2H)
    # Layer 3: block-diagonal into two output lanes.
    z1 = jnp.zeros((H, 1), dt)
    w3 = jnp.block([[w3j, z1], [z1, w3v]])                                # (2H, 2)
    b3 = jnp.concatenate([b3j, b3v], axis=1)                              # (1, 2)
    return (w1s, w1a, b1, w2, b2, w3, b3)


def _round_up(x, m):
    return ((x + m - 1) // m) * m


# ----------------------------------------------------------------------------
# Forward wrapper.
# ----------------------------------------------------------------------------
def qtran_forward(states, actions, packed_params, *, block_b=4096,
                  compute_dtype=jnp.bfloat16):
    """
    states:  (B, state_dim)
    actions: (B, n_agents, action_dim)
    returns: (joint_q_value (B, 1), v_value (B, 1))
    """
    B, S = states.shape
    NA = actions.shape[1] * actions.shape[2]
    actions_flat = actions.reshape(B, NA)     # contiguous view, no concat buffer
    w1s, w1a, b1, w2, b2, w3, b3 = packed_params
    H2 = w1s.shape[1]

    # bf16 MXU feeds (f32 accumulation inside the kernel); biases stay f32.
    states_c = states.astype(compute_dtype)
    actions_c = actions_flat.astype(compute_dtype)
    w1s_c = w1s.astype(compute_dtype)
    w1a_c = w1a.astype(compute_dtype)
    w2_c = w2.astype(compute_dtype)
    w3_c = w3.astype(compute_dtype)

    # Batch tile: multiple of 8, large (per-step overhead amortization), but
    # capped so big batches keep >= 4 grid steps for v7x megacore sharding.
    block_b = max(8, (int(block_b) // 8) * 8)
    tb = min(block_b, max(8, _round_up(pl.cdiv(B, 4), 8)))
    grid = (pl.cdiv(B, tb),)

    resident = lambda a: pl.BlockSpec(a.shape, lambda i: (0,) * a.ndim)

    itemsize = jnp.dtype(compute_dtype).itemsize
    w_bytes = (w1s_c.size + w1a_c.size + w2_c.size + w3_c.size) * itemsize \
        + (b1.size + b2.size + b3.size) * 4

    flops = 2 * B * (S * H2 + NA * H2 + H2 * H2 + H2 * 2)
    bytes_accessed = int(B * (S + NA) * itemsize + B * 2 * 4 + w_bytes)

    # Explicit scoped-VMEM limit (matters on v5e whose default is 16 MiB when
    # callers push block_b past ~8k rows); computed from the real footprint.
    vmem_needed = (2 * tb * (S + NA) * itemsize      # double-buffered input tiles
                   + 2 * tb * 2 * 4                  # double-buffered output tile
                   + 2 * w_bytes                     # resident (double-buffered) weights
                   + 2 * tb * H2 * 4                 # f32 h1/h2 live temporaries
                   + (4 << 20))                      # headroom
    vmem_limit = int(min(max(vmem_needed, 32 << 20), 48 << 20))

    out = pl.pallas_call(
        _qtran_fused_kernel,
        out_shape=jax.ShapeDtypeStruct((B, 2), jnp.float32),
        grid=grid,
        in_specs=[
            pl.BlockSpec((tb, S), lambda i: (i, 0)),    # states tile
            pl.BlockSpec((tb, NA), lambda i: (i, 0)),   # flat actions tile
            resident(w1s_c), resident(w1a_c), resident(b1),
            resident(w2_c), resident(b2), resident(w3_c), resident(b3),
        ],
        out_specs=pl.BlockSpec((tb, 2), lambda i: (i, 0)),
        compiler_params=pltpu.CompilerParams(
            dimension_semantics=("parallel",),
            vmem_limit_bytes=vmem_limit),
        cost_estimate=pl.CostEstimate(
            flops=flops, transcendentals=0, bytes_accessed=bytes_accessed),
    )(states_c, actions_c, w1s_c, w1a_c, b1, w2_c, b2, w3_c, b3)

    return out[:, 0:1], out[:, 1:2]


# ----------------------------------------------------------------------------
# Pure-JAX reference (mirrors the PyTorch forward exactly, all f32).
# ----------------------------------------------------------------------------
def _reference(states, actions, joint_params, v_params):
    def mlp(x, p):
        w1, b1, w2, b2, w3, b3 = p
        h = jnp.maximum(x @ w1 + b1, 0.0)
        h = jnp.maximum(h @ w2 + b2, 0.0)
        return h @ w3 + b3

    B = states.shape[0]
    joint_input = jnp.concatenate([states, actions.reshape(B, -1)], -1)
    return mlp(joint_input, joint_params), mlp(states, v_params)


if __name__ == "__main__":
    # Small, forward-consistent shapes (hidden_dim=64 => fused width 128 lanes).
    batch_size, n_agents, state_dim, action_dim, hidden_dim = 8, 3, 16, 4, 64

    key = jax.random.PRNGKey(0)
    k_s, k_a, k_joint, k_v = jax.random.split(key, 4)

    states = jax.random.normal(k_s, (batch_size, state_dim), jnp.float32)
    actions = jax.random.normal(k_a, (batch_size, n_agents, action_dim),
                                jnp.float32)

    joint_params = make_mlp_params(
        k_joint, state_dim + n_agents * action_dim, hidden_dim, 1)
    v_params = make_mlp_params(k_v, state_dim, hidden_dim, 1)

    # One-time weight packing (done outside the hot path).
    packed = pack_qtran_params(joint_params, v_params, state_dim)

    ref_q, ref_v = _reference(states, actions, joint_params, v_params)

    # Production path: bf16 MXU feeds, f32 accumulation (looser parity check).
    fwd_bf16 = jax.jit(functools.partial(qtran_forward,
                                         compute_dtype=jnp.bfloat16))
    joint_q, v_value = fwd_bf16(states, actions, packed)
    jax.block_until_ready((joint_q, v_value))
    assert joint_q.shape == (batch_size, 1) and v_value.shape == (batch_size, 1)
    assert jnp.allclose(joint_q, ref_q, atol=5e-2, rtol=5e-2)
    assert jnp.allclose(v_value, ref_v, atol=5e-2, rtol=5e-2)

    # Strict-parity path: full f32 compute, 1e-4 check against the reference.
    fwd_f32 = jax.jit(functools.partial(qtran_forward,
                                        compute_dtype=jnp.float32))
    joint_q32, v_value32 = fwd_f32(states, actions, packed)
    jax.block_until_ready((joint_q32, v_value32))
    assert jnp.allclose(joint_q32, ref_q, atol=1e-4, rtol=1e-4)
    assert jnp.allclose(v_value32, ref_v, atol=1e-4, rtol=1e-4)

    print("KERNEL_OK")
</pallas_src>

<mosaic_0001>
module attributes {stable_mosaic.version = 11 : i64} {
  func.func @_qtran_fused_kernel(%arg0: i32, %arg1: memref<8x16xbf16, #tpu.memory_space<vmem>>, %arg2: memref<8x12xbf16, #tpu.memory_space<vmem>>, %arg3: memref<16x128xbf16, #tpu.memory_space<vmem>>, %arg4: memref<12x128xbf16, #tpu.memory_space<vmem>>, %arg5: memref<1x128xf32, #tpu.memory_space<vmem>>, %arg6: memref<128x128xbf16, #tpu.memory_space<vmem>>, %arg7: memref<1x128xf32, #tpu.memory_space<vmem>>, %arg8: memref<128x2xbf16, #tpu.memory_space<vmem>>, %arg9: memref<1x2xf32, #tpu.memory_space<vmem>>, %arg10: memref<8x2xf32, #tpu.memory_space<vmem>>) attributes {dimension_semantics = [#tpu.dimension_semantics<parallel>], iteration_bounds = array<i64: 1>, scalar_prefetch = 0 : i64, scratch_operands = 0 : i64, tpu.core_type = #tpu.core_type<tc>, window_params = [{transform_indices = @transform_0, window_bounds = array<i64: 8, 16>}, {transform_indices = @transform_1, window_bounds = array<i64: 8, 12>}, {pipeline_mode = #tpu.pipeline_mode<synchronous>, transform_indices = @transform_2, window_bounds = array<i64: 16, 128>}, {pipeline_mode = #tpu.pipeline_mode<synchronous>, transform_indices = @transform_3, window_bounds = array<i64: 12, 128>}, {pipeline_mode = #tpu.pipeline_mode<synchronous>, transform_indices = @transform_4, window_bounds = array<i64: 1, 128>}, {pipeline_mode = #tpu.pipeline_mode<synchronous>, transform_indices = @transform_5, window_bounds = array<i64: 128, 128>}, {pipeline_mode = #tpu.pipeline_mode<synchronous>, transform_indices = @transform_6, window_bounds = array<i64: 1, 128>}, {pipeline_mode = #tpu.pipeline_mode<synchronous>, transform_indices = @transform_7, window_bounds = array<i64: 128, 2>}, {pipeline_mode = #tpu.pipeline_mode<synchronous>, transform_indices = @transform_8, window_bounds = array<i64: 1, 2>}, {transform_indices = @transform_9, window_bounds = array<i64: 8, 2>}]} {
    %c0 = arith.constant 0 : index
    %c0_0 = arith.constant 0 : index
    %0 = vector.load %arg1[%c0, %c0_0] : memref<8x16xbf16, #tpu.memory_space<vmem>>, vector<8x16xbf16>
    %c0_1 = arith.constant 0 : index
    %c0_2 = arith.constant 0 : index
    %1 = vector.load %arg3[%c0_1, %c0_2] : memref<16x128xbf16, #tpu.memory_space<vmem>>, vector<16x128xbf16>
    %cst = arith.constant dense<0.000000e+00> : vector<8x128xf32>
    %2 = tpu.matmul %0, %1, %cst {dimension_numbers = #tpu.dot_dimension_numbers<[1], [0], [0], [1], [0, 0, 1, 1], [], []>} : vector<8x16xbf16>, vector<16x128xbf16>, vector<8x128xf32> -> vector<8x128xf32>
    %c0_3 = arith.constant 0 : index
    %c0_4 = arith.constant 0 : index
    %3 = vector.load %arg2[%c0_3, %c0_4] : memref<8x12xbf16, #tpu.memory_space<vmem>>, vector<8x12xbf16>
    %c0_5 = arith.constant 0 : index
    %c0_6 = arith.constant 0 : index
    %4 = vector.load %arg4[%c0_5, %c0_6] : memref<12x128xbf16, #tpu.memory_space<vmem>>, vector<12x128xbf16>
    %cst_7 = arith.constant dense<0.000000e+00> : vector<8x128xf32>
    %5 = tpu.matmul %3, %4, %cst_7 {dimension_numbers = #tpu.dot_dimension_numbers<[1], [0], [0], [1], [0, 0, 1, 1], [], []>} : vector<8x12xbf16>, vector<12x128xbf16>, vector<8x128xf32> -> vector<8x128xf32>
    %6 = arith.addf %2, %5 : vector<8x128xf32>
    %c0_8 = arith.constant 0 : index
    %c0_9 = arith.constant 0 : index
    %7 = vector.load %arg5[%c0_8, %c0_9] : memref<1x128xf32, #tpu.memory_space<vmem>>, vector<1x128xf32>
    %8 = vector.broadcast %7 : vector<1x128xf32> to vector<8x128xf32>
    %9 = arith.addf %6, %8 : vector<8x128xf32>
    %cst_10 = arith.constant 0.000000e+00 : f32
    %10 = vector.broadcast %cst_10 : f32 to vector<8x128xf32>
    %11 = arith.maximumf %9, %10 : vector<8x128xf32>
    %12 = arith.truncf %11 : vector<8x128xf32> to vector<8x128xbf16>
    %c0_11 = arith.constant 0 : index
    %c0_12 = arith.constant 0 : index
    %13 = vector.load %arg6[%c0_11, %c0_12] : memref<128x128xbf16, #tpu.memory_space<vmem>>, vector<128x128xbf16>
    %cst_13 = arith.constant dense<0.000000e+00> : vector<8x128xf32>
    %14 = tpu.matmul %12, %13, %cst_13 {dimension_numbers = #tpu.dot_dimension_numbers<[1], [0], [0], [1], [0, 0, 1, 1], [], []>} : vector<8x128xbf16>, vector<128x128xbf16>, vector<8x128xf32> -> vector<8x128xf32>
    %c0_14 = arith.constant 0 : index
    %c0_15 = arith.constant 0 : index
    %15 = vector.load %arg7[%c0_14, %c0_15] : memref<1x128xf32, #tpu.memory_space<vmem>>, vector<1x128xf32>
    %16 = vector.broadcast %15 : vector<1x128xf32> to vector<8x128xf32>
    %17 = arith.addf %14, %16 : vector<8x128xf32>
    %cst_16 = arith.constant 0.000000e+00 : f32
    %18 = vector.broadcast %cst_16 : f32 to vector<8x128xf32>
    %19 = arith.maximumf %17, %18 : vector<8x128xf32>
    %20 = arith.truncf %19 : vector<8x128xf32> to vector<8x128xbf16>
    %c0_17 = arith.constant 0 : index
    %c0_18 = arith.constant 0 : index
    %21 = vector.load %arg8[%c0_17, %c0_18] : memref<128x2xbf16, #tpu.memory_space<vmem>>, vector<128x2xbf16>
    %cst_19 = arith.constant dense<0.000000e+00> : vector<8x2xf32>
    %22 = tpu.matmul %20, %21, %cst_19 {dimension_numbers = #tpu.dot_dimension_numbers<[1], [0], [0], [1], [0, 0, 1, 1], [], []>} : vector<8x128xbf16>, vector<128x2xbf16>, vector<8x2xf32> -> vector<8x2xf32>
    %c0_20 = arith.constant 0 : index
    %c0_21 = arith.constant 0 : index
    %23 = vector.load %arg9[%c0_20, %c0_21] : memref<1x2xf32, #tpu.memory_space<vmem>>, vector<1x2xf32>
    %24 = vector.broadcast %23 : vector<1x2xf32> to vector<8x2xf32>
    %25 = arith.addf %22, %24 : vector<8x2xf32>
    %c0_22 = arith.constant 0 : index
    %c0_23 = arith.constant 0 : index
    %26 = vector.load %arg10[%c0_22, %c0_23] : memref<8x2xf32, #tpu.memory_space<vmem>>, vector<8x2xf32>
    tpu.vector_store %arg10[%c0_22, %c0_23], %25 {strides = array<i32>} : memref<8x2xf32, #tpu.memory_space<vmem>>, vector<8x2xf32>,
    return
  }
  func.func @transform_0(%arg0: i32) -> (i32, i32) {
    %c0_i32 = arith.constant 0 : i32
    %c0_i32_0 = arith.constant 0 : i32
    return %arg0, %c0_i32 : i32, i32
  }
  func.func @transform_1(%arg0: i32) -> (i32, i32) {
    %c0_i32 = arith.constant 0 : i32
    %c0_i32_0 = arith.constant 0 : i32
    return %arg0, %c0_i32 : i32, i32
  }
  func.func @transform_2(%arg0: i32) -> (i32, i32) {
    %c0_i32 = arith.constant 0 : i32
    %c0_i32_0 = arith.constant 0 : i32
    %c0_i32_1 = arith.constant 0 : i32
    return %c0_i32, %c0_i32_0 : i32, i32
  }
  func.func @transform_3(%arg0: i32) -> (i32, i32) {
    %c0_i32 = arith.constant 0 : i32
    %c0_i32_0 = arith.constant 0 : i32
    %c0_i32_1 = arith.constant 0 : i32
    return %c0_i32, %c0_i32_0 : i32, i32
  }
  func.func @transform_4(%arg0: i32) -> (i32, i32) {
    %c0_i32 = arith.constant 0 : i32
    %c0_i32_0 = arith.constant 0 : i32
    %c0_i32_1 = arith.constant 0 : i32
    return %c0_i32, %c0_i32_0 : i32, i32
  }
  func.func @transform_5(%arg0: i32) -> (i32, i32) {
    %c0_i32 = arith.constant 0 : i32
    %c0_i32_0 = arith.constant 0 : i32
    %c0_i32_1 = arith.constant 0 : i32
    return %c0_i32, %c0_i32_0 : i32, i32
  }
  func.func @transform_6(%arg0: i32) -> (i32, i32) {
    %c0_i32 = arith.constant 0 : i32
    %c0_i32_0 = arith.constant 0 : i32
    %c0_i32_1 = arith.constant 0 : i32
    return %c0_i32, %c0_i32_0 : i32, i32
  }
  func.func @transform_7(%arg0: i32) -> (i32, i32) {
    %c0_i32 = arith.constant 0 : i32
    %c0_i32_0 = arith.constant 0 : i32
    %c0_i32_1 = arith.constant 0 : i32
    return %c0_i32, %c0_i32_0 : i32, i32
  }
  func.func @transform_8(%arg0: i32) -> (i32, i32) {
    %c0_i32 = arith.constant 0 : i32
    %c0_i32_0 = arith.constant 0 : i32
    %c0_i32_1 = arith.constant 0 : i32
    return %c0_i32, %c0_i32_0 : i32, i32
  }
  func.func @transform_9(%arg0: i32) -> (i32, i32) {
    %c0_i32 = arith.constant 0 : i32
    %c0_i32_0 = arith.constant 0 : i32
    return %arg0, %c0_i32 : i32, i32
  }
}

</mosaic_0001>

<llo_original>
// kernel: qtran_forward.1
$region0: #{qtran_forward.1}
  #allocation0 [shape = 'u32[]', space=smem, size = 0x4, offset = 0x4, fixed_abs, tag = 'smem constant byte address 0x4 - core index']
  #allocation1 [shape = 'u32[144,128]{1,0:T(1,128)}', space=vmem, size = 0x12000, scoped, tag = 'internal scratch']
  %s0 = inlined_call_operand.vmem [shape: bf16[8,16], index: 0, kind: input, shape index: {}]
  %s1 = inlined_call_operand.vmem [shape: bf16[8,12], index: 1, kind: input, shape index: {}]
  %s2 = inlined_call_operand.vmem [shape: bf16[16,128], index: 2, kind: input, shape index: {}]
  %s3 = inlined_call_operand.vmem [shape: bf16[12,128], index: 3, kind: input, shape index: {}]
  %s4 = inlined_call_operand.vmem [shape: f32[1,128], index: 4, kind: input, shape index: {}]
  %s5 = inlined_call_operand.vmem [shape: bf16[128,128], index: 5, kind: input, shape index: {}]
  %s6 = inlined_call_operand.vmem [shape: f32[1,128], index: 6, kind: input, shape index: {}]
  %s7 = inlined_call_operand.vmem [shape: bf16[128,2], index: 7, kind: input, shape index: {}]
  %s8 = inlined_call_operand.vmem [shape: f32[1,2], index: 8, kind: input, shape index: {}]
  %s9 = inlined_call_operand.vmem [shape: f32[8,2], index: 9, kind: output, shape index: {}]
  %s10 = sld [smem:[#allocation0]]
  $region46: #{qtran_forward.1} parent=0
    _
  %s12 = ssub.s32 1, %s10
  %s13 = scalar_select 0, %s12, %s10
  // Predicated region
  $region2: #{qtran_forward.1} parent=0 // pred_check
    _
  $region3: #{qtran_forward.1} parent=0 // pred_check_branch
    %15 = sbr.rel (0) target = $region5
  $region4: #{qtran_forward.1} parent=0 // pred_region
    _
  $region5: #{qtran_forward.1} parent=0 // pred_fallthru
    _
  // Predicated region
  $region6: #{qtran_forward.1} parent=0 // pred_check
    _
  $region7: #{qtran_forward.1} parent=0 // pred_check_branch
    %17 = sbr.rel (0) target = $region9
  $region8: #{qtran_forward.1} parent=0 // pred_region
    _
  $region9: #{qtran_forward.1} parent=0 // pred_fallthru
    _
  // Predicated region
  $region10: #{qtran_forward.1} parent=0 // pred_check
    _
  $region11: #{qtran_forward.1} parent=0 // pred_check_branch
    %19 = sbr.rel (0) target = $region13
  $region12: #{qtran_forward.1} parent=0 // pred_region
    _
  $region13: #{qtran_forward.1} parent=0 // pred_fallthru
    _
  // Predicated region
  $region14: #{qtran_forward.1} parent=0 // pred_check
    _
  $region15: #{qtran_forward.1} parent=0 // pred_check_branch
    %21 = sbr.rel (0) target = $region17
  $region16: #{qtran_forward.1} parent=0 // pred_region
    _
  $region17: #{qtran_forward.1} parent=0 // pred_fallthru
    _
  // Predicated region
  $region18: #{qtran_forward.1} parent=0 // pred_check
    _
  $region19: #{qtran_forward.1} parent=0 // pred_check_branch
    %23 = sbr.rel (0) target = $region21
  $region20: #{qtran_forward.1} parent=0 // pred_region
    _
  $region21: #{qtran_forward.1} parent=0 // pred_fallthru
    _
  // Predicated region
  $region22: #{qtran_forward.1} parent=0 // pred_check
    _
  $region23: #{qtran_forward.1} parent=0 // pred_check_branch
    %25 = sbr.rel (0) target = $region25
  $region24: #{qtran_forward.1} parent=0 // pred_region
    _
  $region25: #{qtran_forward.1} parent=0 // pred_fallthru
    _
  // Predicated region
  $region26: #{qtran_forward.1} parent=0 // pred_check
    _
  $region27: #{qtran_forward.1} parent=0 // pred_check_branch
    %27 = sbr.rel (0) target = $region29
  $region28: #{qtran_forward.1} parent=0 // pred_region
    _
  $region29: #{qtran_forward.1} parent=0 // pred_fallthru
    _
  // Predicated region
  $region30: #{qtran_forward.1} parent=0 // pred_check
    _
  $region31: #{qtran_forward.1} parent=0 // pred_check_branch
    %29 = sbr.rel (0) target = $region33
  $region32: #{qtran_forward.1} parent=0 // pred_region
    _
  $region33: #{qtran_forward.1} parent=0 // pred_fallthru
    _
  // Predicated region
  $region34: #{qtran_forward.1} parent=0 // pred_check
    _
  $region35: #{qtran_forward.1} parent=0 // pred_check_branch
    %31 = sbr.rel (0) target = $region37
  $region36: #{qtran_forward.1} parent=0 // pred_region
    _
  $region37: #{qtran_forward.1} parent=0 // pred_fallthru
    _
  %v33 = vld [vmem:[%s0] sm:$0xf]
  %v34 = vld [vmem:[%s2] sm:$0xf]
  %v35 = vld [vmem:[%s2 + $0x4] sm:$0xf]
  %v36 = vld [vmem:[%s1] sm:$0xf]
  %v37 = vld [vmem:[%s3] sm:$0xf]
  %v38 = vld [vmem:[%s3 + $0x4] sm:$0x3]
  %v41 = vunpack.c.l.b16 %v37
  %v42 = vunpack.c.l.b16 %v38
  %v43 = vpack.c.b16 %v42, %v41
  %vm44 = vcmask 97280
  %v46 = vsel %vm44, %v36, 0
  %vm48 = vcmask 1045504
  %v50 = vsel %vm48, %v43, 0
  %52 = vmatprep.subr.bf16.mxu0 0
  %53 = vmatpush1.bf16.msra.mxu0 %v50
  %54 = vmatprep.subr.bf16.mxu0 0
  %55 = vmatpush1.bf16.msra.mxu0 0
  %56 = vmatprep.subr.bf16.mxu0 0
  %57 = vmatpush1.bf16.msra.mxu0 0
  %58 = vmatprep.subr.bf16.mxu0 0
  %59 = vmatpush1.bf16.msra.mxu0 0
  %60 = vmatprep.subr.bf16.mxu0 0
  %61 = vmatpush1.bf16.msra.mxu0 0
  %62 = vmatprep.subr.bf16.mxu0 0
  %63 = vmatpush1.bf16.msra.mxu0 0
  %64 = vmatprep.subr.bf16.mxu0 0
  %65 = vmatpush1.bf16.msra.mxu0 0
  %66 = vmatprep.subr.bf16.mxu0 0
  %67 = vmatpush1.bf16.msra.mxu0 0
  %68 = vmatprep.subr.bf16.mxu0 0
  %69 = vmatpush1.bf16.msra.mxu0 0
  %70 = vmatprep.subr.bf16.mxu0 0
  %71 = vmatpush1.bf16.msra.mxu0 0
  %72 = vmatprep.subr.bf16.mxu0 0
  %73 = vmatpush1.bf16.msra.mxu0 0
  %74 = vmatprep.subr.bf16.mxu0 0
  %75 = vmatpush1.bf16.msra.mxu0 0
  %76 = vmatprep.subr.bf16.mxu0 0
  %77 = vmatpush1.bf16.msra.mxu0 0
  %78 = vmatprep.subr.bf16.mxu0 0
  %79 = vmatpush1.bf16.msra.mxu0 0
  %80 = vmatprep.subr.bf16.mxu0 0
  %81 = vmatpush1.bf16.msra.mxu0 0
  %82 = vmatprep.subr.bf16.mxu0 0
  %83 = vmatpush1.bf16.msra.mxu0 0
  %84 = vmatprep.mubr.bf16.mxu0 0
  %85 = vmatmul.mubr.bf16.gmra.mrb[0].mxu0 %v46
  %v86 = vpop.f32.mrb[0].mxu0
  %v87 = vadd.f32 0.0, %v86
  %v88 = vpop.f32.mrb[0].mxu0
  %v89 = vpop.f32.mrb[0].mxu0
  %v90 = vpop.f32.mrb[0].mxu0
  %91 = vdwg.mxu0
  %v94 = vunpack.c.l.b16 %v34
  %v95 = vunpack.c.l.b16 %v35
  %v96 = vpack.c.b16 %v95, %v94
  %vm98 = vcmask 130048
  %v100 = vsel %vm98, %v33, 0
  %102 = vmatprep.subr.bf16.mxu0 0
  %103 = vmatpush1.bf16.msra.mxu0 %v96
  %104 = vmatprep.subr.bf16.mxu0 0
  %105 = vmatpush1.bf16.msra.mxu0 0
  %106 = vmatprep.subr.bf16.mxu0 0
  %107 = vmatpush1.bf16.msra.mxu0 0
  %108 = vmatprep.subr.bf16.mxu0 0
  %109 = vmatpush1.bf16.msra.mxu0 0
  %110 = vmatprep.subr.bf16.mxu0 0
  %111 = vmatpush1.bf16.msra.mxu0 0
  %112 = vmatprep.subr.bf16.mxu0 0
  %113 = vmatpush1.bf16.msra.mxu0 0
  %114 = vmatprep.subr.bf16.mxu0 0
  %115 = vmatpush1.bf16.msra.mxu0 0
  %116 = vmatprep.subr.bf16.mxu0 0
  %117 = vmatpush1.bf16.msra.mxu0 0
  %118 = vmatprep.subr.bf16.mxu0 0
  %119 = vmatpush1.bf16.msra.mxu0 0
  %120 = vmatprep.subr.bf16.mxu0 0
  %121 = vmatpush1.bf16.msra.mxu0 0
  %122 = vmatprep.subr.bf16.mxu0 0
  %123 = vmatpush1.bf16.msra.mxu0 0
  %124 = vmatprep.subr.bf16.mxu0 0
  %125 = vmatpush1.bf16.msra.mxu0 0
  %126 = vmatprep.subr.bf16.mxu0 0
  %127 = vmatpush1.bf16.msra.mxu0 0
  %128 = vmatprep.subr.bf16.mxu0 0
  %129 = vmatpush1.bf16.msra.mxu0 0
  %130 = vmatprep.subr.bf16.mxu0 0
  %131 = vmatpush1.bf16.msra.mxu0 0
  %132 = vmatprep.subr.bf16.mxu0 0
  %133 = vmatpush1.bf16.msra.mxu0 0
  %134 = vmatprep.mubr.bf16.mxu0 0
  %135 = vmatmul.mubr.bf16.gmra.mrb[0].mxu0 %v100
  %v136 = vpop.f32.mrb[0].mxu0
  %v137 = vadd.f32 %v87, %v136
  %v138 = vpop.f32.mrb[0].mxu0
  %v139 = vpop.f32.mrb[0].mxu0
  %v140 = vpop.f32.mrb[0].mxu0
  %141 = vdwg.mxu0
  %v142 = vld [vmem:[%s4] sm:$0x1]
  %v144 = vlaneseq
  %v145 = vshrl.u32 %v144, 7
  %v146 = vsub.s32 0, %v145
  %v147 = vrot.slane %v142, %v146
  %v149 = vadd.f32 %v137, %v147
  %v150 = vmax.f32 %v149, 0.0
  %v151 = vpack.c.bf16 %v150, %v150
  %v152 = vld [vmem:[%s5] sm:$0xf]
  %v153 = vld [vmem:[%s5 + $0x4] sm:$0xf]
  %v154 = vld [vmem:[%s5 + $0x8] sm:$0xf]
  %v155 = vld [vmem:[%s5 + $0xc] sm:$0xf]
  %v156 = vld [vmem:[%s5 + $0x10] sm:$0xf]
  %v157 = vld [vmem:[%s5 + $0x14] sm:$0xf]
  %v158 = vld [vmem:[%s5 + $0x18] sm:$0xf]
  %v159 = vld [vmem:[%s5 + $0x1c] sm:$0xf]
  %v160 = vld [vmem:[%s5 + $0x20] sm:$0xf]
  %v161 = vld [vmem:[%s5 + $0x24] sm:$0xf]
  %v162 = vld [vmem:[%s5 + $0x28] sm:$0xf]
  %v163 = vld [vmem:[%s5 + $0x2c] sm:$0xf]
  %v164 = vld [vmem:[%s5 + $0x30] sm:$0xf]
  %v165 = vld [vmem:[%s5 + $0x34] sm:$0xf]
  %v166 = vld [vmem:[%s5 + $0x38] sm:$0xf]
  %v167 = vld [vmem:[%s5 + $0x3c] sm:$0xf]
  %v168 = vld [vmem:[%s6] sm:$0x1]
  %v170 = vlaneseq
  %v171 = vshrl.u32 %v170, 7
  %v172 = vsub.s32 0, %v171
  %v173 = vrot.slane %v168, %v172
  %v191 = vunpack.c.l.b16 %v152
  %v192 = vunpack.c.l.b16 %v153
  %v193 = vunpack.c.l.b16 %v154
  %v194 = vunpack.c.l.b16 %v155
  %v195 = vunpack.c.l.b16 %v156
  %v196 = vunpack.c.l.b16 %v157
  %v197 = vunpack.c.l.b16 %v158
  %v198 = vunpack.c.l.b16 %v159
  %v199 = vunpack.c.l.b16 %v160
  %v200 = vunpack.c.l.b16 %v161
  %v201 = vunpack.c.l.b16 %v162
  %v202 = vunpack.c.l.b16 %v163
  %v203 = vunpack.c.l.b16 %v164
  %v204 = vunpack.c.l.b16 %v165
  %v205 = vunpack.c.l.b16 %v166
  %v206 = vunpack.c.l.b16 %v167
  %v207 = vpack.c.b16 %v192, %v191
  %v208 = vpack.c.b16 %v194, %v193
  %v209 = vpack.c.b16 %v196, %v195
  %v210 = vpack.c.b16 %v198, %v197
  %v211 = vpack.c.b16 %v200, %v199
  %v212 = vpack.c.b16 %v202, %v201
  %v213 = vpack.c.b16 %v204, %v203
  %v214 = vpack.c.b16 %v206, %v205
  %223 = vmatprep.subr.bf16.mxu0 0
  %224 = vmatpush1.bf16.msra.mxu0 %v207
  %225 = vmatprep.subr.bf16.mxu0 0
  %226 = vmatpush1.bf16.msra.mxu0 %v208
  %227 = vmatprep.subr.bf16.mxu0 0
  %228 = vmatpush1.bf16.msra.mxu0 %v209
  %229 = vmatprep.subr.bf16.mxu0 0
  %230 = vmatpush1.bf16.msra.mxu0 %v210
  %231 = vmatprep.subr.bf16.mxu0 0
  %232 = vmatpush1.bf16.msra.mxu0 %v211
  %233 = vmatprep.subr.bf16.mxu0 0
  %234 = vmatpush1.bf16.msra.mxu0 %v212
  %235 = vmatprep.subr.bf16.mxu0 0
  %236 = vmatpush1.bf16.msra.mxu0 %v213
  %237 = vmatprep.subr.bf16.mxu0 0
  %238 = vmatpush1.bf16.msra.mxu0 %v214
  %239 = vmatprep.subr.bf16.mxu0 0
  %240 = vmatpush1.bf16.msra.mxu0 0
  %241 = vmatprep.subr.bf16.mxu0 0
  %242 = vmatpush1.bf16.msra.mxu0 0
  %243 = vmatprep.subr.bf16.mxu0 0
  %244 = vmatpush1.bf16.msra.mxu0 0
  %245 = vmatprep.subr.bf16.mxu0 0
  %246 = vmatpush1.bf16.msra.mxu0 0
  %247 = vmatprep.subr.bf16.mxu0 0
  %248 = vmatpush1.bf16.msra.mxu0 0
  %249 = vmatprep.subr.bf16.mxu0 0
  %250 = vmatpush1.bf16.msra.mxu0 0
  %251 = vmatprep.subr.bf16.mxu0 0
  %252 = vmatpush1.bf16.msra.mxu0 0
  %253 = vmatprep.subr.bf16.mxu0 0
  %254 = vmatpush1.bf16.msra.mxu0 0
  %255 = vmatprep.mubr.bf16.mxu0 0
  %256 = vmatmul.mubr.bf16.gmra.mrb[0].mxu0 %v151
  %v257 = vpop.f32.mrb[0].mxu0
  %v258 = vadd.f32 %v173, %v257
  %v259 = vpop.f32.mrb[0].mxu0
  %v260 = vpop.f32.mrb[0].mxu0
  %v261 = vpop.f32.mrb[0].mxu0
  %262 = vdwg.mxu0
  %v263 = vmax.f32 %v258, 0.0
  %v264 = vpack.c.bf16 %v263, %v263
  %v265 = vld [vmem:[%s7] sm:$0xf]
  %v266 = vld [vmem:[%s7 + $0x4] sm:$0xf]
  %v267 = vld [vmem:[%s7 + $0x8] sm:$0xf]
  %v268 = vld [vmem:[%s7 + $0xc] sm:$0xf]
  %v269 = vld [vmem:[%s7 + $0x10] sm:$0xf]
  %v270 = vld [vmem:[%s7 + $0x14] sm:$0xf]
  %v271 = vld [vmem:[%s7 + $0x18] sm:$0xf]
  %v272 = vld [vmem:[%s7 + $0x1c] sm:$0xf]
  %v273 = vld [vmem:[%s7 + $0x20] sm:$0xf]
  %v274 = vld [vmem:[%s7 + $0x24] sm:$0xf]
  %v275 = vld [vmem:[%s7 + $0x28] sm:$0xf]
  %v276 = vld [vmem:[%s7 + $0x2c] sm:$0xf]
  %v277 = vld [vmem:[%s7 + $0x30] sm:$0xf]
  %v278 = vld [vmem:[%s7 + $0x34] sm:$0xf]
  %v279 = vld [vmem:[%s7 + $0x38] sm:$0xf]
  %v280 = vld [vmem:[%s7 + $0x3c] sm:$0xf]
  %v281 = vld [vmem:[%s8] sm:$0x1]
  %v283 = vlaneseq
  %v284 = vshrl.u32 %v283, 7
  %v285 = vsub.s32 0, %v284
  %v286 = vrot.slane %v281, %v285
  %v304 = vunpack.c.l.b16 %v265
  %v305 = vunpack.c.l.b16 %v266
  %v306 = vunpack.c.l.b16 %v267
  %v307 = vunpack.c.l.b16 %v268
  %v308 = vunpack.c.l.b16 %v269
  %v309 = vunpack.c.l.b16 %v270
  %v310 = vunpack.c.l.b16 %v271
  %v311 = vunpack.c.l.b16 %v272
  %v312 = vunpack.c.l.b16 %v273
  %v313 = vunpack.c.l.b16 %v274
  %v314 = vunpack.c.l.b16 %v275
  %v315 = vunpack.c.l.b16 %v276
  %v316 = vunpack.c.l.b16 %v277
  %v317 = vunpack.c.l.b16 %v278
  %v318 = vunpack.c.l.b16 %v279
  %v319 = vunpack.c.l.b16 %v280
  %v320 = vpack.c.b16 %v305, %v304
  %v321 = vpack.c.b16 %v307, %v306
  %v322 = vpack.c.b16 %v309, %v308
  %v323 = vpack.c.b16 %v311, %v310
  %v324 = vpack.c.b16 %v313, %v312
  %v325 = vpack.c.b16 %v315, %v314
  %v326 = vpack.c.b16 %v317, %v316
  %v327 = vpack.c.b16 %v319, %v318
  %336 = vmatprep.subr.bf16.mxu0 0
  %337 = vmatpush1.bf16.msra.mxu0 %v320
  %338 = vmatprep.subr.bf16.mxu0 0
  %339 = vmatpush1.bf16.msra.mxu0 %v321
  %340 = vmatprep.subr.bf16.mxu0 0
  %341 = vmatpush1.bf16.msra.mxu0 %v322
  %342 = vmatprep.subr.bf16.mxu0 0
  %343 = vmatpush1.bf16.msra.mxu0 %v323
  %344 = vmatprep.subr.bf16.mxu0 0
  %345 = vmatpush1.bf16.msra.mxu0 %v324
  %346 = vmatprep.subr.bf16.mxu0 0
  %347 = vmatpush1.bf16.msra.mxu0 %v325
  %348 = vmatprep.subr.bf16.mxu0 0
  %349 = vmatpush1.bf16.msra.mxu0 %v326
  %350 = vmatprep.subr.bf16.mxu0 0
  %351 = vmatpush1.bf16.msra.mxu0 %v327
  %352 = vmatprep.subr.bf16.mxu0 0
  %353 = vmatpush1.bf16.msra.mxu0 0
  %354 = vmatprep.subr.bf16.mxu0 0
  %355 = vmatpush1.bf16.msra.mxu0 0
  %356 = vmatprep.subr.bf16.mxu0 0
  %357 = vmatpush1.bf16.msra.mxu0 0
  %358 = vmatprep.subr.bf16.mxu0 0
  %359 = vmatpush1.bf16.msra.mxu0 0
  %360 = vmatprep.subr.bf16.mxu0 0
  %361 = vmatpush1.bf16.msra.mxu0 0
  %362 = vmatprep.subr.bf16.mxu0 0
  %363 = vmatpush1.bf16.msra.mxu0 0
  %364 = vmatprep.subr.bf16.mxu0 0
  %365 = vmatpush1.bf16.msra.mxu0 0
  %366 = vmatprep.subr.bf16.mxu0 0
  %367 = vmatpush1.bf16.msra.mxu0 0
  %368 = vmatprep.mubr.bf16.mxu0 0
  %369 = vmatmul.mubr.bf16.gmra.mrb[0].mxu0 %v264
  %v370 = vpop.f32.mrb[0].mxu0
  %v371 = vadd.f32 %v286, %v370
  %v372 = vpop.f32.mrb[0].mxu0
  %v373 = vpop.f32.mrb[0].mxu0
  %v374 = vpop.f32.mrb[0].mxu0
  %375 = vdwg.mxu0
  %vm376 = vcmask 15360
  %377 = vst.msk [vmem:[%s9] sm:$0xff] %vm376, %v371
  // Predicated region
  $region38: #{qtran_forward.1} parent=0 // pred_check
    _
  $region39: #{qtran_forward.1} parent=0 // pred_check_branch
    %379 = sbr.rel (0) target = $region41
  $region40: #{qtran_forward.1} parent=0 // pred_region
    _
  $region41: #{qtran_forward.1} parent=0 // pred_fallthru
    _
  // Predicated region
  $region42: #{qtran_forward.1} parent=0 // pred_check
    _
  $region43: #{qtran_forward.1} parent=0 // pred_check_branch
    %381 = sbr.rel (0) target = $region45
  $region44: #{qtran_forward.1} parent=0 // pred_region
    _
  $region45: #{qtran_forward.1} parent=0 // pred_fallthru
    _

</llo_original>
